<compile_context>
chip_gen: v7x
topology: tpu7x:2x2x1
jax: 0.10.0
libtpu: 0.0.40
codegen_flags: <defaults>
</compile_context>

<pallas_src>
import functools

import jax
import jax.numpy as jnp
from jax.experimental import pallas as pl
from jax.experimental.pallas import tpu as pltpu


def _attention_kernel(q_ref, k_ref, v_ref, w_ref,
                      ctx_ref, attnw_ref, energ_ref, *, compute_dtype):
    # Block of BB batches per grid step.
    q = q_ref[...].astype(compute_dtype)       # (BB, T, Dt)
    k = k_ref[...].astype(compute_dtype)       # (BB, S, De)
    v = v_ref[...].astype(compute_dtype)       # (BB, S, Dt)
    w = w_ref[...].astype(compute_dtype)       # (Dt, De)  -- torch nn.Linear weight layout

    BB, T, Dt = q.shape
    _, S, De = k.shape

    # proj = K @ W.T, with the batch folded into the M dimension and NO transpose:
    # contract De (axis 1 of k2d) with De (axis 1 of w).
    k2d = k.reshape(BB * S, De)
    proj = jax.lax.dot_general(
        k2d, w,
        dimension_numbers=(((1,), (1,)), ((), ())),
        preferred_element_type=jnp.float32)            # (BB*S, Dt) f32
    proj = proj.reshape(BB, S, Dt).astype(compute_dtype)

    # energies[b,t,s] = sum_d q[b,t,d] * proj[b,s,d]  (batched, contraction on Dt, no .T)
    energies = jnp.einsum("btd,bsd->bts", q, proj,
                          preferred_element_type=jnp.float32)   # (BB, T, S) f32

    # Numerically stable softmax over src_len, all element-wise math in f32.
    m = jnp.max(energies, axis=-1, keepdims=True)
    e = jnp.exp(energies - m)
    denom = jnp.sum(e, axis=-1, keepdims=True)
    weights = e * pl.reciprocal(denom, approx=False)            # (BB, T, S) f32

    # context = weights @ V  (batched, contraction on S)
    ctx = jnp.einsum("bts,bsd->btd", weights.astype(compute_dtype), v,
                     preferred_element_type=jnp.float32)        # (BB, T, Dt) f32

    energ_ref[...] = energies.astype(energ_ref.dtype)
    attnw_ref[...] = weights.astype(attnw_ref.dtype)
    ctx_ref[...] = ctx.astype(ctx_ref.dtype)


def _choose_block_b(B, T, S, Dt, De, in_itemsize, budget_bytes=8 << 20):
    """Largest BB dividing B whose double-buffered block footprint fits the budget,
    keeping >= 2 grid steps (when possible) so both v7x TensorCores get work."""
    def step_bytes(bb):
        in_b = bb * (T * Dt + S * De + S * Dt) * in_itemsize
        out_b = bb * (T * Dt + 2 * T * S) * 4     # outputs written in f32 / input dtype
        return 2 * (in_b + out_b) + Dt * De * in_itemsize
    best = 1
    for bb in range(1, B + 1):
        if B % bb:
            continue
        if bb > 1 and B // bb < 2:
            continue                               # keep grid length >= 2 for megacore
        if step_bytes(bb) <= budget_bytes:
            best = bb
    return best


def attention_general(hidden, encoder_outputs, encoder_value, w, *,
                      block_b=None, compute_dtype=jnp.bfloat16):
    """
    hidden:          (B, T, Dt)  float32     (Q)
    encoder_outputs: (B, S, De)  float32     (K)
    encoder_value:   (B, S, Dt)  float32     (V)
    w:               (Dt, De)    float32     (torch nn.Linear weight)
    returns: context (B, T, Dt), attn_weights (B, T, S), attn_energies (B, T, S)
    """
    B, T, Dt = hidden.shape
    _, S, De = encoder_outputs.shape
    assert encoder_value.shape == (B, S, Dt)
    assert w.shape == (Dt, De)

    if block_b is None:
        block_b = _choose_block_b(B, T, S, Dt, De, jnp.dtype(hidden.dtype).itemsize)
    assert B % block_b == 0
    grid = (B // block_b,)

    out_shapes = (
        jax.ShapeDtypeStruct((B, T, Dt), hidden.dtype),   # context
        jax.ShapeDtypeStruct((B, T, S), jnp.float32),     # attn_weights
        jax.ShapeDtypeStruct((B, T, S), jnp.float32),     # attn_energies
    )

    kernel = functools.partial(_attention_kernel, compute_dtype=compute_dtype)

    grid_spec = pltpu.PrefetchScalarGridSpec(
        num_scalar_prefetch=0,
        grid=grid,
        in_specs=[
            pl.BlockSpec((block_b, T, Dt), lambda b: (b, 0, 0)),   # Q
            pl.BlockSpec((block_b, S, De), lambda b: (b, 0, 0)),   # K
            pl.BlockSpec((block_b, S, Dt), lambda b: (b, 0, 0)),   # V
            pl.BlockSpec((Dt, De), lambda b: (0, 0)),              # W (shared across steps)
        ],
        out_specs=[
            pl.BlockSpec((block_b, T, Dt), lambda b: (b, 0, 0)),
            pl.BlockSpec((block_b, T, S), lambda b: (b, 0, 0)),
            pl.BlockSpec((block_b, T, S), lambda b: (b, 0, 0)),
        ],
    )

    return pl.pallas_call(
        kernel,
        out_shape=out_shapes,
        grid_spec=grid_spec,
        compiler_params=pltpu.CompilerParams(
            dimension_semantics=("parallel",),
            vmem_limit_bytes=48 << 20,   # < v7x 64 MiB physical, > default scoped limits
        ),
    )(hidden, encoder_outputs, encoder_value, w)


def _reference(hidden, encoder_outputs, encoder_value, w, compute_dtype=jnp.float32):
    """Pure-JAX reference mirroring the kernel's compute dtype."""
    cd = compute_dtype
    hp = jax.lax.Precision.HIGHEST
    proj = jnp.einsum("bse,de->bsd", encoder_outputs.astype(cd), w.astype(cd),
                      preferred_element_type=jnp.float32, precision=hp)
    energies = jnp.einsum("btd,bsd->bts", hidden.astype(cd), proj.astype(cd),
                          preferred_element_type=jnp.float32, precision=hp)
    weights = jax.nn.softmax(energies, axis=-1)
    context = jnp.einsum("bts,bsd->btd", weights.astype(cd), encoder_value.astype(cd),
                         preferred_element_type=jnp.float32, precision=hp)
    return context.astype(hidden.dtype), weights, energies


if __name__ == "__main__":
    # Small but lane-dense shapes: S = 128 keeps the two (B, T, S) output stores full-lane.
    B, T, S = 4, 8, 128
    Dt, De = 64, 64

    key = jax.random.PRNGKey(0)
    kq, kk, kv, kw = jax.random.split(key, 4)
    hidden = jax.random.normal(kq, (B, T, Dt), dtype=jnp.float32)
    encoder_outputs = jax.random.normal(kk, (B, S, De), dtype=jnp.float32)
    encoder_value = jax.random.normal(kv, (B, S, Dt), dtype=jnp.float32)
    # Deterministic init for nn.Linear(enc_dim, trg_dim, bias=False) weight: (Dt, De)
    w = jax.random.normal(kw, (Dt, De), dtype=jnp.float32) * (1.0 / jnp.sqrt(De))

    # 1) Exact f32-MXU path: tight check against f32 reference.
    ctx32, aw32, ae32 = attention_general(hidden, encoder_outputs, encoder_value, w,
                                          compute_dtype=jnp.float32)
    jax.block_until_ready((ctx32, aw32, ae32))
    ctx_r, aw_r, ae_r = _reference(hidden, encoder_outputs, encoder_value, w,
                                   compute_dtype=jnp.float32)
    assert jnp.allclose(ae32, ae_r, atol=1e-3, rtol=1e-3), "f32 energies mismatch"
    assert jnp.allclose(aw32, aw_r, atol=1e-3, rtol=1e-3), "f32 weights mismatch"
    assert jnp.allclose(ctx32, ctx_r, atol=1e-3, rtol=1e-3), "f32 context mismatch"

    # 2) Fast bf16-MXU path (default): check against a reference using the same casts.
    ctxb, awb, aeb = attention_general(hidden, encoder_outputs, encoder_value, w,
                                       compute_dtype=jnp.bfloat16)
    jax.block_until_ready((ctxb, awb, aeb))
    ctx_rb, aw_rb, ae_rb = _reference(hidden, encoder_outputs, encoder_value, w,
                                      compute_dtype=jnp.bfloat16)
    assert jnp.allclose(aeb, ae_rb, atol=1e-2, rtol=1e-2), "bf16 energies mismatch"
    assert jnp.allclose(awb, aw_rb, atol=1e-2, rtol=1e-2), "bf16 weights mismatch"
    assert jnp.allclose(ctxb, ctx_rb, atol=1e-2, rtol=1e-2), "bf16 context mismatch"

    print("KERNEL_OK")
</pallas_src>

<mosaic_0001>
module attributes {stable_mosaic.version = 11 : i64} {
  func.func @_attention_kernel(%arg0: i32, %arg1: memref<2x8x64xf32, #tpu.memory_space<vmem>>, %arg2: memref<2x128x64xf32, #tpu.memory_space<vmem>>, %arg3: memref<2x128x64xf32, #tpu.memory_space<vmem>>, %arg4: memref<64x64xf32, #tpu.memory_space<vmem>>, %arg5: memref<2x8x64xf32, #tpu.memory_space<vmem>>, %arg6: memref<2x8x128xf32, #tpu.memory_space<vmem>>, %arg7: memref<2x8x128xf32, #tpu.memory_space<vmem>>) attributes {dimension_semantics = [#tpu.dimension_semantics<parallel>], iteration_bounds = array<i64: 2>, scalar_prefetch = 0 : i64, scratch_operands = 0 : i64, tpu.core_type = #tpu.core_type<tc>, window_params = [{transform_indices = @transform_0, window_bounds = array<i64: 2, 8, 64>}, {transform_indices = @transform_1, window_bounds = array<i64: 2, 128, 64>}, {transform_indices = @transform_2, window_bounds = array<i64: 2, 128, 64>}, {pipeline_mode = #tpu.pipeline_mode<synchronous>, transform_indices = @transform_3, window_bounds = array<i64: 64, 64>}, {transform_indices = @transform_4, window_bounds = array<i64: 2, 8, 64>}, {transform_indices = @transform_5, window_bounds = array<i64: 2, 8, 128>}, {transform_indices = @transform_6, window_bounds = array<i64: 2, 8, 128>}]} {
    %c0 = arith.constant 0 : index
    %c0_0 = arith.constant 0 : index
    %c0_1 = arith.constant 0 : index
    %0 = vector.load %arg1[%c0, %c0_0, %c0_1] : memref<2x8x64xf32, #tpu.memory_space<vmem>>, vector<2x8x64xf32>
    %c0_2 = arith.constant 0 : index
    %c0_3 = arith.constant 0 : index
    %c0_4 = arith.constant 0 : index
    %1 = vector.load %arg2[%c0_2, %c0_3, %c0_4] : memref<2x128x64xf32, #tpu.memory_space<vmem>>, vector<2x128x64xf32>
    %c0_5 = arith.constant 0 : index
    %c0_6 = arith.constant 0 : index
    %c0_7 = arith.constant 0 : index
    %2 = vector.load %arg3[%c0_5, %c0_6, %c0_7] : memref<2x128x64xf32, #tpu.memory_space<vmem>>, vector<2x128x64xf32>
    %c0_8 = arith.constant 0 : index
    %c0_9 = arith.constant 0 : index
    %3 = vector.load %arg4[%c0_8, %c0_9] : memref<64x64xf32, #tpu.memory_space<vmem>>, vector<64x64xf32>
    %4 = vector.shape_cast %1 : vector<2x128x64xf32> to vector<256x64xf32>
    %cst = arith.constant dense<0.000000e+00> : vector<256x64xf32>
    %5 = tpu.matmul %4, %3, %cst {dimension_numbers = #tpu.dot_dimension_numbers<[1], [1], [0], [0], [0, 0, 1, 0], [], []>} : vector<256x64xf32>, vector<64x64xf32>, vector<256x64xf32> -> vector<256x64xf32>
    %6 = vector.shape_cast %5 : vector<256x64xf32> to vector<2x128x64xf32>
    "tpu.trace_start"() <{level = 10 : i32, message = "btd,bsd->bts"}> : () -> ()
    %cst_10 = arith.constant dense<0.000000e+00> : vector<2x8x128xf32>
    %7 = tpu.matmul %0, %6, %cst_10 {dimension_numbers = #tpu.dot_dimension_numbers<[2], [2], [1], [1], [0, 0, 0, 1, 1, 1], [0], [0]>} : vector<2x8x64xf32>, vector<2x128x64xf32>, vector<2x8x128xf32> -> vector<2x8x128xf32>
    "tpu.trace_stop"() : () -> ()
    %cst_11 = arith.constant dense<0xFF800000> : vector<2x8xf32>
    %8 = vector.multi_reduction <maximumf>, %7, %cst_11 [2] : vector<2x8x128xf32> to vector<2x8xf32>
    %9 = vector.shape_cast %8 : vector<2x8xf32> to vector<2x8x1xf32>
    %10 = vector.broadcast %9 : vector<2x8x1xf32> to vector<2x8x128xf32>
    %11 = arith.subf %7, %10 : vector<2x8x128xf32>
    %12 = math.exp %11 : vector<2x8x128xf32>
    %cst_12 = arith.constant dense<0.000000e+00> : vector<2x8xf32>
    %13 = vector.multi_reduction <add>, %12, %cst_12 [2] : vector<2x8x128xf32> to vector<2x8xf32>
    %14 = vector.shape_cast %13 : vector<2x8xf32> to vector<2x8x1xf32>
    %15 = tpu.reciprocal %14 : vector<2x8x1xf32> -> vector<2x8x1xf32>
    %16 = vector.broadcast %15 : vector<2x8x1xf32> to vector<2x8x128xf32>
    %17 = arith.mulf %12, %16 : vector<2x8x128xf32>
    "tpu.trace_start"() <{level = 10 : i32, message = "bts,bsd->btd"}> : () -> ()
    %cst_13 = arith.constant dense<0.000000e+00> : vector<2x8x64xf32>
    %18 = tpu.matmul %17, %2, %cst_13 {dimension_numbers = #tpu.dot_dimension_numbers<[2], [1], [1], [2], [0, 0, 0, 1, 1, 2], [0], [0]>} : vector<2x8x128xf32>, vector<2x128x64xf32>, vector<2x8x64xf32> -> vector<2x8x64xf32>
    "tpu.trace_stop"() : () -> ()
    %c0_14 = arith.constant 0 : index
    %c0_15 = arith.constant 0 : index
    %c0_16 = arith.constant 0 : index
    %19 = vector.load %arg7[%c0_14, %c0_15, %c0_16] : memref<2x8x128xf32, #tpu.memory_space<vmem>>, vector<2x8x128xf32>
    tpu.vector_store %arg7[%c0_14, %c0_15, %c0_16], %7 {strides = array<i32>} : memref<2x8x128xf32, #tpu.memory_space<vmem>>, vector<2x8x128xf32>,
    %c0_17 = arith.constant 0 : index
    %c0_18 = arith.constant 0 : index
    %c0_19 = arith.constant 0 : index
    %20 = vector.load %arg6[%c0_17, %c0_18, %c0_19] : memref<2x8x128xf32, #tpu.memory_space<vmem>>, vector<2x8x128xf32>
    tpu.vector_store %arg6[%c0_17, %c0_18, %c0_19], %17 {strides = array<i32>} : memref<2x8x128xf32, #tpu.memory_space<vmem>>, vector<2x8x128xf32>,
    %c0_20 = arith.constant 0 : index
    %c0_21 = arith.constant 0 : index
    %c0_22 = arith.constant 0 : index
    %21 = vector.load %arg5[%c0_20, %c0_21, %c0_22] : memref<2x8x64xf32, #tpu.memory_space<vmem>>, vector<2x8x64xf32>
    tpu.vector_store %arg5[%c0_20, %c0_21, %c0_22], %18 {strides = array<i32>} : memref<2x8x64xf32, #tpu.memory_space<vmem>>, vector<2x8x64xf32>,
    return
  }
  func.func @transform_0(%arg0: i32) -> (i32, i32, i32) {
    %c0_i32 = arith.constant 0 : i32
    %c0_i32_0 = arith.constant 0 : i32
    %c0_i32_1 = arith.constant 0 : i32
    return %arg0, %c0_i32, %c0_i32_0 : i32, i32, i32
  }
  func.func @transform_1(%arg0: i32) -> (i32, i32, i32) {
    %c0_i32 = arith.constant 0 : i32
    %c0_i32_0 = arith.constant 0 : i32
    %c0_i32_1 = arith.constant 0 : i32
    return %arg0, %c0_i32, %c0_i32_0 : i32, i32, i32
  }
  func.func @transform_2(%arg0: i32) -> (i32, i32, i32) {
    %c0_i32 = arith.constant 0 : i32
    %c0_i32_0 = arith.constant 0 : i32
    %c0_i32_1 = arith.constant 0 : i32
    return %arg0, %c0_i32, %c0_i32_0 : i32, i32, i32
  }
  func.func @transform_3(%arg0: i32) -> (i32, i32) {
    %c0_i32 = arith.constant 0 : i32
    %c0_i32_0 = arith.constant 0 : i32
    %c0_i32_1 = arith.constant 0 : i32
    return %c0_i32, %c0_i32_0 : i32, i32
  }
  func.func @transform_4(%arg0: i32) -> (i32, i32, i32) {
    %c0_i32 = arith.constant 0 : i32
    %c0_i32_0 = arith.constant 0 : i32
    %c0_i32_1 = arith.constant 0 : i32
    return %arg0, %c0_i32, %c0_i32_0 : i32, i32, i32
  }
  func.func @transform_5(%arg0: i32) -> (i32, i32, i32) {
    %c0_i32 = arith.constant 0 : i32
    %c0_i32_0 = arith.constant 0 : i32
    %c0_i32_1 = arith.constant 0 : i32
    return %arg0, %c0_i32, %c0_i32_0 : i32, i32, i32
  }
  func.func @transform_6(%arg0: i32) -> (i32, i32, i32) {
    %c0_i32 = arith.constant 0 : i32
    %c0_i32_0 = arith.constant 0 : i32
    %c0_i32_1 = arith.constant 0 : i32
    return %arg0, %c0_i32, %c0_i32_0 : i32, i32, i32
  }
}

</mosaic_0001>

<llo_original>
// kernel: tpu_custom_call.1
$region0: #{tpu_custom_call.1}
  #allocation0 [shape = 'u32[]', space=smem, size = 0x4, offset = 0x4, fixed_abs, tag = 'smem constant byte address 0x4 - core index']
  #allocation1 [shape = 'u32[144,128]{1,0:T(1,128)}', space=vmem, size = 0x12000, scoped, tag = 'internal scratch']
  %s0 = inlined_call_operand.vmem [shape: f32[4,8,64], index: 0, kind: input, shape index: {}]
  %s1 = inlined_call_operand.vmem [shape: f32[4,128,64], index: 1, kind: input, shape index: {}]
  %s2 = inlined_call_operand.vmem [shape: f32[4,128,64], index: 2, kind: input, shape index: {}]
  %s3 = inlined_call_operand.vmem [shape: f32[64,64], index: 3, kind: input, shape index: {}]
  %s4 = inlined_call_operand.hbm [shape: f32[4,8,64], index: 4, kind: output, shape index: {0}]
  %s5 = inlined_call_operand.hbm [shape: f32[4,8,128], index: 5, kind: output, shape index: {1}]
  %s6 = inlined_call_operand.hbm [shape: f32[4,8,128], index: 6, kind: output, shape index: {2}]
  %7 = xla_tuple %s4, %s5, %s6
  %s8 = sld [smem:[#allocation0]]
  $region65: #{tpu_custom_call.1} parent=0
    _
  %s10 = ssub.s32 1, %s8
  %s11 = scalar_select 0, %s10, %s8
  $region1: #{tpu_custom_call.1} parent=0
    #allocation2 [shape = 'u8[16384]{0}', space=vmem, size = 0x4000, scoped, tag = 'output window, operand 0']
    #allocation3 [shape = 's32[2]{0}', space=sflag, size = 0x8, scoped, tag = 'scoped memory for tpu_custom_call.1']
    #allocation4 [shape = 'u8[16384]{0}', space=vmem, size = 0x4000, scoped, tag = 'output window, operand 1']
    #allocation5 [shape = 's32[2]{0}', space=sflag, size = 0x8, scoped, tag = 'scoped memory for tpu_custom_call.1']
    #allocation6 [shape = 'u8[16384]{0}', space=vmem, size = 0x4000, scoped, tag = 'output window, operand 2']
    %12 = vsyncpa [#allocation3], 0
    %s13 = scalar_lea.sflag [#allocation3], 1
    %14 = vsyncpa %s13, 0
    %15 = vsyncpa [#allocation5], 0
    %s16 = scalar_lea.sflag [#allocation5], 1
    %17 = vsyncpa %s16, 0
    loop: start=0, step=1, limit=4
    $region2: #{tpu_custom_call.1} parent=1 // loop_pre_header
      _
    $region3: #{tpu_custom_call.1} parent=1 // loop_header
      %s19 = sphi 0, %s23
      %p20 = scmp.ge.s32.totalorder %s19, 4
      %s29 = sphi 0, %s31
      %s32 = sphi 0, %s29
      %s33 = sphi 0, %s32
      %s49 = sphi 0, %s33
      %s55 = sphi 0, %s57
      %s58 = sphi 0, %s55
      %s59 = sphi 0, %s58
      %s75 = sphi 0, %s59
      %s81 = sphi 0, %s83
      %s84 = sphi 0, %s81
      %s85 = sphi 0, %s84
      %s101 = sphi 0, %s85
      %s105 = sphi 0, %s105
      %s107 = sphi 0, %s105
      %s108 = sphi 0, %s107
      %s122 = sphi 0, %s108
      %s128 = sphi 0, %s130
      %s131 = sphi 0, %s128
      %s132 = sphi 0, %s131
      %s148 = sphi 0, %s132
      %s154 = sphi 0, %s156
      %s157 = sphi 0, %s154
      %s158 = sphi 0, %s157
      %s174 = sphi 0, %s158
      %s180 = sphi 0, %s182
      %s183 = sphi 0, %s180
      %s184 = sphi 0, %s183
      %s200 = sphi 0, %s184
    $region4: #{tpu_custom_call.1} parent=1 // loop_header_branch
      %22 = sbr.rel (%p20) target = $region8
    $region5: #{tpu_custom_call.1} parent=1 // loop_body
      %s24 = ssub.s32 %s19, 1
      %s25 = ssub.s32 %s19, 2
      %s26 = sadd.s32 %s19, 1
      %s27 = ssub.s32 %s19, %s26
      %p28 = scmp.eq.s32.totalorder %s27, 0
      %s30 = sadd.s32 %s29, 1
      %s31 = scalar_select %p28, %s29, %s30
      %p34 = pneg %p28
      %p35 = scmp.eq.s32.totalorder %s19, 1
      %p36 = por %p34, %p35
      %p37 = scmp.ne.s32.totalorder %s29, %s32
      %p38 = scmp.eq.s32.totalorder %s19, 0
      %p39 = por %p37, %p38
      %p40 = scmp.ne.s32.totalorder %s29, %s32
      %p41 = scmp.eq.s32.totalorder %s24, 1
      %p42 = por %p40, %p41
      %p43 = scmp.ne.s32.totalorder %s32, %s33
      %p44 = scmp.eq.s32.totalorder %s24, 0
      %p45 = por %p43, %p44
      %p46 = scmp.ne.s32.totalorder %s32, %s33
      %p47 = scmp.eq.s32.totalorder %s25, 1
      %p48 = por %p46, %p47
      %p50 = scmp.ne.s32.totalorder %s33, %s49
      %p51 = scmp.eq.s32.totalorder %s25, 0
      %p52 = por %p50, %p51
      %s53 = ssub.s32 %s19, %s26
      %p54 = scmp.eq.s32.totalorder %s53, 0
      %s56 = sadd.s32 %s55, 1
      %s57 = scalar_select %p54, %s55, %s56
      %p60 = pneg %p54
      %p61 = scmp.eq.s32.totalorder %s19, 1
      %p62 = por %p60, %p61
      %p63 = scmp.ne.s32.totalorder %s55, %s58
      %p64 = scmp.eq.s32.totalorder %s19, 0
      %p65 = por %p63, %p64
      %p66 = scmp.ne.s32.totalorder %s55, %s58
      %p67 = scmp.eq.s32.totalorder %s24, 1
      %p68 = por %p66, %p67
      %p69 = scmp.ne.s32.totalorder %s58, %s59
      %p70 = scmp.eq.s32.totalorder %s24, 0
      %p71 = por %p69, %p70
      %p72 = scmp.ne.s32.totalorder %s58, %s59
      %p73 = scmp.eq.s32.totalorder %s25, 1
      %p74 = por %p72, %p73
      %p76 = scmp.ne.s32.totalorder %s59, %s75
      %p77 = scmp.eq.s32.totalorder %s25, 0
      %p78 = por %p76, %p77
      %s79 = ssub.s32 %s19, %s26
      %p80 = scmp.eq.s32.totalorder %s79, 0
      %s82 = sadd.s32 %s81, 1
      %s83 = scalar_select %p80, %s81, %s82
      %p86 = pneg %p80
      %p87 = scmp.eq.s32.totalorder %s19, 1
      %p88 = por %p86, %p87
      %p89 = scmp.ne.s32.totalorder %s81, %s84
      %p90 = scmp.eq.s32.totalorder %s19, 0
      %p91 = por %p89, %p90
      %p92 = scmp.ne.s32.totalorder %s81, %s84
      %p93 = scmp.eq.s32.totalorder %s24, 1
      %p94 = por %p92, %p93
      %p95 = scmp.ne.s32.totalorder %s84, %s85
      %p96 = scmp.eq.s32.totalorder %s24, 0
      %p97 = por %p95, %p96
      %p98 = scmp.ne.s32.totalorder %s84, %s85
      %p99 = scmp.eq.s32.totalorder %s25, 1
      %p100 = por %p98, %p99
      %p102 = scmp.ne.s32.totalorder %s85, %s101
      %p103 = scmp.eq.s32.totalorder %s25, 0
      %p104 = por %p102, %p103
      %s106 = sadd.s32 %s105, 1
      %p109 = scmp.eq.s32.totalorder %s19, 1
      %p110 = scmp.ne.s32.totalorder %s105, %s107
      %p111 = scmp.eq.s32.totalorder %s19, 0
      %p112 = por %p110, %p111
      %p113 = scmp.ne.s32.totalorder %s105, %s107
      %p114 = scmp.eq.s32.totalorder %s24, 1
      %p115 = por %p113, %p114
      %p116 = scmp.ne.s32.totalorder %s107, %s108
      %p117 = scmp.eq.s32.totalorder %s24, 0
      %p118 = por %p116, %p117
      %p119 = scmp.ne.s32.totalorder %s107, %s108
      %p120 = scmp.eq.s32.totalorder %s25, 1
      %p121 = por %p119, %p120
      %p123 = scmp.ne.s32.totalorder %s108, %s122
      %p124 = scmp.eq.s32.totalorder %s25, 0
      %p125 = por %p123, %p124
      %s126 = ssub.s32 %s19, %s26
      %p127 = scmp.eq.s32.totalorder %s126, 0
      %s129 = sadd.s32 %s128, 1
      %s130 = scalar_select %p127, %s128, %s129
      %p133 = pneg %p127
      %p134 = scmp.eq.s32.totalorder %s19, 1
      %p135 = por %p133, %p134
      %p136 = scmp.ne.s32.totalorder %s128, %s131
      %p137 = scmp.eq.s32.totalorder %s19, 0
      %p138 = por %p136, %p137
      %p139 = scmp.ne.s32.totalorder %s128, %s131
      %p140 = scmp.eq.s32.totalorder %s24, 1
      %p141 = por %p139, %p140
      %p142 = scmp.ne.s32.totalorder %s131, %s132
      %p143 = scmp.eq.s32.totalorder %s24, 0
      %p144 = por %p142, %p143
      %p145 = scmp.ne.s32.totalorder %s131, %s132
      %p146 = scmp.eq.s32.totalorder %s25, 1
      %p147 = por %p145, %p146
      %p149 = scmp.ne.s32.totalorder %s132, %s148
      %p150 = scmp.eq.s32.totalorder %s25, 0
      %p151 = por %p149, %p150
      %s152 = ssub.s32 %s19, %s26
      %p153 = scmp.eq.s32.totalorder %s152, 0
      %s155 = sadd.s32 %s154, 1
      %s156 = scalar_select %p153, %s154, %s155
      %p159 = pneg %p153
      %p160 = scmp.eq.s32.totalorder %s19, 1
      %p161 = por %p159, %p160
      %p162 = scmp.ne.s32.totalorder %s154, %s157
      %p163 = scmp.eq.s32.totalorder %s19, 0
      %p164 = por %p162, %p163
      %p165 = scmp.ne.s32.totalorder %s154, %s157
      %p166 = scmp.eq.s32.totalorder %s24, 1
      %p167 = por %p165, %p166
      %p168 = scmp.ne.s32.totalorder %s157, %s158
      %p169 = scmp.eq.s32.totalorder %s24, 0
      %p170 = por %p168, %p169
      %p171 = scmp.ne.s32.totalorder %s157, %s158
      %p172 = scmp.eq.s32.totalorder %s25, 1
      %p173 = por %p171, %p172
      %p175 = scmp.ne.s32.totalorder %s158, %s174
      %p176 = scmp.eq.s32.totalorder %s25, 0
      %p177 = por %p175, %p176
      %s178 = ssub.s32 %s19, %s26
      %p179 = scmp.eq.s32.totalorder %s178, 0
      %s181 = sadd.s32 %s180, 1
      %s182 = scalar_select %p179, %s180, %s181
      %p185 = pneg %p179
      %p186 = scmp.eq.s32.totalorder %s19, 1
      %p187 = por %p185, %p186
      %p188 = scmp.ne.s32.totalorder %s180, %s183
      %p189 = scmp.eq.s32.totalorder %s19, 0
      %p190 = por %p188, %p189
      %p191 = scmp.ne.s32.totalorder %s180, %s183
      %p192 = scmp.eq.s32.totalorder %s24, 1
      %p193 = por %p191, %p192
      %p194 = scmp.ne.s32.totalorder %s183, %s184
      %p195 = scmp.eq.s32.totalorder %s24, 0
      %p196 = por %p194, %p195
      %p197 = scmp.ne.s32.totalorder %s183, %s184
      %p198 = scmp.eq.s32.totalorder %s25, 1
      %p199 = por %p197, %p198
      %p201 = scmp.ne.s32.totalorder %s184, %s200
      %p202 = scmp.eq.s32.totalorder %s25, 0
      %p203 = por %p201, %p202
      %p204 = scmp.le.s32.totalorder 1, %s19
      %p205 = scmp.lt.s32.totalorder %s19, 3
      %p206 = pnand %p204, %p205
      %p207 = pneg %p206
      // Predicated region
      $region9: #{tpu_custom_call.1} parent=5 // pred_check
        _
      $region10: #{tpu_custom_call.1} parent=5 // pred_check_branch
        %209 = sbr.rel (%p206) target = $region12
      $region11: #{tpu_custom_call.1} parent=5 // pred_region
        %s210 = ssub.s32 %s19, 1
        // Predicated region
        $region13: #{tpu_custom_call.1} parent=11 // pred_check
          %p211 = pneg %p118
        $region14: #{tpu_custom_call.1} parent=11 // pred_check_branch
          %213 = sbr.rel (%p211) target = $region16
        $region15: #{tpu_custom_call.1} parent=11 // pred_region
          _
        $region16: #{tpu_custom_call.1} parent=11 // pred_fallthru
          _
      $region12: #{tpu_custom_call.1} parent=5 // pred_fallthru
        _
      %p214 = scmp.lt.s32.totalorder %s19, 2
      // Predicated region
      $region17: #{tpu_custom_call.1} parent=5 // pred_check
        %p215 = pneg %p214
      $region18: #{tpu_custom_call.1} parent=5 // pred_check_branch
        %217 = sbr.rel (%p215) target = $region20
      $region19: #{tpu_custom_call.1} parent=5 // pred_region
        // Predicated region
        $region21: #{tpu_custom_call.1} parent=19 // pred_check
          %p218 = pneg %p39
        $region22: #{tpu_custom_call.1} parent=19 // pred_check_branch
          %220 = sbr.rel (%p218) target = $region24
        $region23: #{tpu_custom_call.1} parent=19 // pred_region
          %s221 = smul.u32 2, %s19
          %p222 = scmp.lt.s32.totalorder %s221, 3
          %s223 = scalar_select %p222, %s221, 3
          %s224 = smul.addr %s223, 8
          %s225 = scalar_lea.vmem %s0, %s224
          %s226 = smul.u32 2, %s19
        $region24: #{tpu_custom_call.1} parent=19 // pred_fallthru
          _
        // Predicated region
        $region25: #{tpu_custom_call.1} parent=19 // pred_check
          %p227 = pneg %p65
        $region26: #{tpu_custom_call.1} parent=19 // pred_check_branch
          %229 = sbr.rel (%p227) target = $region28
        $region27: #{tpu_custom_call.1} parent=19 // pred_region
          %s230 = smul.u32 2, %s19
          %p231 = scmp.lt.s32.totalorder %s230, 3
          %s232 = scalar_select %p231, %s230, 3
          %s233 = smul.addr %s232, 16
          %s234 = smul.addr %s233, 8
          %s235 = scalar_lea.vmem %s1, %s234
          %s236 = smul.u32 2, %s19
        $region28: #{tpu_custom_call.1} parent=19 // pred_fallthru
          _
        // Predicated region
        $region29: #{tpu_custom_call.1} parent=19 // pred_check
          %p237 = pneg %p91
        $region30: #{tpu_custom_call.1} parent=19 // pred_check_branch
          %239 = sbr.rel (%p237) target = $region32
        $region31: #{tpu_custom_call.1} parent=19 // pred_region
          %s240 = smul.u32 2, %s19
          %p241 = scmp.lt.s32.totalorder %s240, 3
          %s242 = scalar_select %p241, %s240, 3
          %s243 = smul.addr %s242, 16
          %s244 = smul.addr %s243, 8
          %s245 = scalar_lea.vmem %s2, %s244
          %s246 = smul.u32 2, %s19
        $region32: #{tpu_custom_call.1} parent=19 // pred_fallthru
          _
      $region20: #{tpu_custom_call.1} parent=5 // pred_fallthru
        _
      %p247 = scmp.le.s32.totalorder 1, %s19
      %p248 = scmp.lt.s32.totalorder %s19, 3
      %p249 = pnand %p247, %p248
      %p250 = pneg %p249
      // Predicated region
      $region33: #{tpu_custom_call.1} parent=5 // pred_check
        _
      $region34: #{tpu_custom_call.1} parent=5 // pred_check_branch
        %252 = sbr.rel (%p249) target = $region36
      $region35: #{tpu_custom_call.1} parent=5 // pred_region
        %s253 = ssub.s32 %s19, 1
        %s254 = smul.u32 2, %s24
        %p255 = scmp.lt.s32.totalorder %s254, 3
        %s256 = scalar_select %p255, %s254, 3
        %s257 = smul.addr %s256, 8
        %s258 = scalar_lea.vmem %s0, %s257
        %p259 = pneg %p45
        %p260 = pneg %p42
        %s261 = smul.u32 2, %s24
        %p262 = scmp.lt.s32.totalorder %s261, 3
        %s263 = scalar_select %p262, %s261, 3
        %s264 = smul.addr %s263, 16
        %s265 = smul.addr %s264, 8
        %s266 = scalar_lea.vmem %s1, %s265
        %p267 = pneg %p71
        %p268 = pneg %p68
        %s269 = smul.u32 2, %s24
        %p270 = scmp.lt.s32.totalorder %s269, 3
        %s271 = scalar_select %p270, %s269, 3
        %s272 = smul.addr %s271, 16
        %s273 = smul.addr %s272, 8
        %s274 = scalar_lea.vmem %s2, %s273
        %p275 = pneg %p97
        %p276 = pneg %p94
        %p277 = pneg %p118
        %p278 = pneg %p115
        %p279 = pneg %p144
        %p280 = pneg %p141
        %s281 = sand.u32 %s131, 1
        %s282 = scalar_lea.sflag [#allocation3], %s281
        %s283 = sand.u32 %s131, 1
        %s284 = smul.addr %s283, 16
        %s285 = scalar_lea.vmem [#allocation2], %s284
        %p286 = pneg %p170
        %p287 = pneg %p167
        %s288 = sand.u32 %s24, 1
        %s289 = scalar_lea.sflag [#allocation5], %s288
        %s290 = sand.u32 %s157, 1
        %s291 = smul.addr %s290, 16
        %s292 = scalar_lea.vmem [#allocation4], %s291
        %p293 = pneg %p196
        %p294 = pneg %p193
        %s295 = sand.u32 %s24, 1
        %s296 = scalar_lea.sflag [#allocation5], %s295
        %s297 = sand.u32 %s183, 1
        %s298 = smul.addr %s297, 16
        %s299 = scalar_lea.vmem [#allocation6], %s298
        %s300 = smul.u32 2, %s24
        %p301 = scmp.lt.s32.totalorder %s300, 3
        %s302 = scalar_select %p301, %s300, 3
        %s303 = smul.addr %s302, 8
        %s304 = scalar_lea.vmem %s0, %s303
        %s305 = smul.u32 2, %s24
        %s306 = smul.u32 2, %s24
        %p307 = scmp.lt.s32.totalorder %s306, 3
        %s308 = scalar_select %p307, %s306, 3
        %s309 = smul.addr %s308, 16
        %s310 = smul.addr %s309, 8
        %s311 = scalar_lea.vmem %s1, %s310
        %s312 = smul.u32 2, %s24
        %s313 = smul.u32 2, %s24
        %p314 = scmp.lt.s32.totalorder %s313, 3
        %s315 = scalar_select %p314, %s313, 3
        %s316 = smul.addr %s315, 16
        %s317 = smul.addr %s316, 8
        %s318 = scalar_lea.vmem %s2, %s317
        %s319 = smul.u32 2, %s24
        %s320 = smul.u32 2, %s24
        %s321 = smul.u32 2, %s24
        %s322 = smul.u32 2, %s24
        %v323 = vld [vmem:[%s304] sm:$0xff]
        %v324 = vld [vmem:[%s304 + $0x8] sm:$0xff]
        %v325 = vld [vmem:[%s311] sm:$0xff]
        %v326 = vld [vmem:[%s311 + $0x8] sm:$0xff]
        %v327 = vld [vmem:[%s311 + $0x10] sm:$0xff]
        %v328 = vld [vmem:[%s311 + $0x18] sm:$0xff]
        %v329 = vld [vmem:[%s311 + $0x20] sm:$0xff]
        %v330 = vld [vmem:[%s311 + $0x28] sm:$0xff]
        %v331 = vld [vmem:[%s311 + $0x30] sm:$0xff]
        %v332 = vld [vmem:[%s311 + $0x38] sm:$0xff]
        %v333 = vld [vmem:[%s311 + $0x40] sm:$0xff]
        %v334 = vld [vmem:[%s311 + $0x48] sm:$0xff]
        %v335 = vld [vmem:[%s311 + $0x50] sm:$0xff]
        %v336 = vld [vmem:[%s311 + $0x58] sm:$0xff]
        %v337 = vld [vmem:[%s311 + $0x60] sm:$0xff]
        %v338 = vld [vmem:[%s311 + $0x68] sm:$0xff]
        %v339 = vld [vmem:[%s311 + $0x70] sm:$0xff]
        %v340 = vld [vmem:[%s311 + $0x78] sm:$0xff]
        %v341 = vld [vmem:[%s311 + $0x80] sm:$0xff]
        %v342 = vld [vmem:[%s311 + $0x88] sm:$0xff]
        %v343 = vld [vmem:[%s311 + $0x90] sm:$0xff]
        %v344 = vld [vmem:[%s311 + $0x98] sm:$0xff]
        %v345 = vld [vmem:[%s311 + $0xa0] sm:$0xff]
        %v346 = vld [vmem:[%s311 + $0xa8] sm:$0xff]
        %v347 = vld [vmem:[%s311 + $0xb0] sm:$0xff]
        %v348 = vld [vmem:[%s311 + $0xb8] sm:$0xff]
        %v349 = vld [vmem:[%s311 + $0xc0] sm:$0xff]
        %v350 = vld [vmem:[%s311 + $0xc8] sm:$0xff]
        %v351 = vld [vmem:[%s311 + $0xd0] sm:$0xff]
        %v352 = vld [vmem:[%s311 + $0xd8] sm:$0xff]
        %v353 = vld [vmem:[%s311 + $0xe0] sm:$0xff]
        %v354 = vld [vmem:[%s311 + $0xe8] sm:$0xff]
        %v355 = vld [vmem:[%s311 + $0xf0] sm:$0xff]
        %v356 = vld [vmem:[%s311 + $0xf8] sm:$0xff]
        %v357 = vld [vmem:[%s318] sm:$0xff]
        %v358 = vld [vmem:[%s318 + $0x8] sm:$0xff]
        %v359 = vld [vmem:[%s318 + $0x10] sm:$0xff]
        %v360 = vld [vmem:[%s318 + $0x18] sm:$0xff]
        %v361 = vld [vmem:[%s318 + $0x20] sm:$0xff]
        %v362 = vld [vmem:[%s318 + $0x28] sm:$0xff]
        %v363 = vld [vmem:[%s318 + $0x30] sm:$0xff]
        %v364 = vld [vmem:[%s318 + $0x38] sm:$0xff]
        %v365 = vld [vmem:[%s318 + $0x40] sm:$0xff]
        %v366 = vld [vmem:[%s318 + $0x48] sm:$0xff]
        %v367 = vld [vmem:[%s318 + $0x50] sm:$0xff]
        %v368 = vld [vmem:[%s318 + $0x58] sm:$0xff]
        %v369 = vld [vmem:[%s318 + $0x60] sm:$0xff]
        %v370 = vld [vmem:[%s318 + $0x68] sm:$0xff]
        %v371 = vld [vmem:[%s318 + $0x70] sm:$0xff]
        %v372 = vld [vmem:[%s318 + $0x78] sm:$0xff]
        %v373 = vld [vmem:[%s318 + $0x80] sm:$0xff]
        %v374 = vld [vmem:[%s318 + $0x88] sm:$0xff]
        %v375 = vld [vmem:[%s318 + $0x90] sm:$0xff]
        %v376 = vld [vmem:[%s318 + $0x98] sm:$0xff]
        %v377 = vld [vmem:[%s318 + $0xa0] sm:$0xff]
        %v378 = vld [vmem:[%s318 + $0xa8] sm:$0xff]
        %v379 = vld [vmem:[%s318 + $0xb0] sm:$0xff]
        %v380 = vld [vmem:[%s318 + $0xb8] sm:$0xff]
        %v381 = vld [vmem:[%s318 + $0xc0] sm:$0xff]
        %v382 = vld [vmem:[%s318 + $0xc8] sm:$0xff]
        %v383 = vld [vmem:[%s318 + $0xd0] sm:$0xff]
        %v384 = vld [vmem:[%s318 + $0xd8] sm:$0xff]
        %v385 = vld [vmem:[%s318 + $0xe0] sm:$0xff]
        %v386 = vld [vmem:[%s318 + $0xe8] sm:$0xff]
        %v387 = vld [vmem:[%s318 + $0xf0] sm:$0xff]
        %v388 = vld [vmem:[%s318 + $0xf8] sm:$0xff]
        %v389 = vld [vmem:[%s3] sm:$0xff]
        %v390 = vld [vmem:[%s3 + $0x8] sm:$0xff]
        %v391 = vld [vmem:[%s3 + $0x10] sm:$0xff]
        %v392 = vld [vmem:[%s3 + $0x18] sm:$0xff]
        %v393 = vld [vmem:[%s3 + $0x20] sm:$0xff]
        %v394 = vld [vmem:[%s3 + $0x28] sm:$0xff]
        %v395 = vld [vmem:[%s3 + $0x30] sm:$0xff]
        %v396 = vld [vmem:[%s3 + $0x38] sm:$0xff]
        %vm397 = vcmask 523264
        %v399 = vsel %vm397, %v325, 0
        %v402 = vsel %vm397, %v326, 0
        %v405 = vsel %vm397, %v327, 0
        %v408 = vsel %vm397, %v328, 0
        %v411 = vsel %vm397, %v329, 0
        %v414 = vsel %vm397, %v330, 0
        %v417 = vsel %vm397, %v331, 0
        %v420 = vsel %vm397, %v332, 0
        %v423 = vsel %vm397, %v333, 0
        %v426 = vsel %vm397, %v334, 0
        %v429 = vsel %vm397, %v335, 0
        %v432 = vsel %vm397, %v336, 0
        %v435 = vsel %vm397, %v337, 0
        %v438 = vsel %vm397, %v338, 0
        %v441 = vsel %vm397, %v339, 0
        %v444 = vsel %vm397, %v340, 0
        %v447 = vsel %vm397, %v341, 0
        %v450 = vsel %vm397, %v342, 0
        %v453 = vsel %vm397, %v343, 0
        %v456 = vsel %vm397, %v344, 0
        %v459 = vsel %vm397, %v345, 0
        %v462 = vsel %vm397, %v346, 0
        %v465 = vsel %vm397, %v347, 0
        %v468 = vsel %vm397, %v348, 0
        %v471 = vsel %vm397, %v349, 0
        %v474 = vsel %vm397, %v350, 0
        %v477 = vsel %vm397, %v351, 0
        %v480 = vsel %vm397, %v352, 0
        %v483 = vsel %vm397, %v353, 0
        %v486 = vsel %vm397, %v354, 0
        %v489 = vsel %vm397, %v355, 0
        %v492 = vsel %vm397, %v356, 0
        %v495 = vsel %vm397, %v389, 0
        %v498 = vsel %vm397, %v390, 0
        %v501 = vsel %vm397, %v391, 0
        %v504 = vsel %vm397, %v392, 0
        %v507 = vsel %vm397, %v393, 0
        %v510 = vsel %vm397, %v394, 0
        %v513 = vsel %vm397, %v395, 0
        %v516 = vsel %vm397, %v396, 0
        %518 = vmatprep.subr.mxu0 0.0
        %519 = vmatpush1.xpose.msra.mxu0 %v495
        %520 = vmatprep.subr.mxu0 0.0
        %521 = vmatpush1.xpose.msra.mxu0 %v498
        %522 = vmatprep.subr.mxu0 0.0
        %523 = vmatpush1.xpose.msra.mxu0 %v501
        %524 = vmatprep.subr.mxu0 0.0
        %525 = vmatpush1.xpose.msra.mxu0 %v504
        %526 = vmatprep.subr.mxu0 0.0
        %527 = vmatpush1.xpose.msra.mxu0 %v507
        %528 = vmatprep.subr.mxu0 0.0
        %529 = vmatpush1.xpose.msra.mxu0 %v510
        %530 = vmatprep.subr.mxu0 0.0
        %531 = vmatpush1.xpose.msra.mxu0 %v513
        %532 = vmatprep.subr.mxu0 0.0
        %533 = vmatpush1.xpose.msra.mxu0 %v516
        %534 = vmatprep.subr.mxu0 0.0
        %535 = vmatpush1.xpose.msra.mxu0 0.0
        %536 = vmatprep.subr.mxu0 0.0
        %537 = vmatpush1.xpose.msra.mxu0 0.0
        %538 = vmatprep.subr.mxu0 0.0
        %539 = vmatpush1.xpose.msra.mxu0 0.0
        %540 = vmatprep.subr.mxu0 0.0
        %541 = vmatpush1.xpose.msra.mxu0 0.0
        %542 = vmatprep.subr.mxu0 0.0
        %543 = vmatpush1.xpose.msra.mxu0 0.0
        %544 = vmatprep.subr.mxu0 0.0
        %545 = vmatpush1.xpose.msra.mxu0 0.0
        %546 = vmatprep.subr.mxu0 0.0
        %547 = vmatpush1.xpose.msra.mxu0 0.0
        %548 = vmatprep.subr.mxu0 0.0
        %549 = vmatpush1.xpose.msra.mxu0 0.0
        %550 = vmatprep.subr.mxu0 0.0
        %551 = vmatpush1.xpose.msra.mxu0 0.0
        %552 = vmatprep.subr.mxu0 0.0
        %553 = vmatpush1.xpose.msra.mxu0 0.0
        %554 = vmatprep.subr.mxu0 0.0
        %555 = vmatpush1.xpose.msra.mxu0 0.0
        %556 = vmatprep.subr.mxu0 0.0
        %557 = vmatpush1.xpose.msra.mxu0 0.0
        %558 = vmatprep.subr.mxu0 0.0
        %559 = vmatpush1.xpose.msra.mxu0 0.0
        %560 = vmatprep.subr.mxu0 0.0
        %561 = vmatpush1.xpose.msra.mxu0 0.0
        %562 = vmatprep.subr.mxu0 0.0
        %563 = vmatpush1.xpose.msra.mxu0 0.0
        %564 = vmatprep.subr.mxu0 0.0
        %565 = vmatpush1.xpose.msra.mxu0 0.0
        %566 = vmatprep.subr.mxu0 0.0
        %567 = vmatpush1.xpose.msra.mxu0 0.0
        %568 = vmatprep.subr.mxu0 0.0
        %569 = vmatpush1.xpose.msra.mxu0 0.0
        %570 = vmatprep.subr.mxu0 0.0
        %571 = vmatpush1.xpose.msra.mxu0 0.0
        %572 = vmatprep.subr.mxu0 0.0
        %573 = vmatpush1.xpose.msra.mxu0 0.0
        %574 = vmatprep.subr.mxu0 0.0
        %575 = vmatpush1.xpose.msra.mxu0 0.0
        %576 = vmatprep.subr.mxu0 0.0
        %577 = vmatpush1.xpose.msra.mxu0 0.0
        %578 = vmatprep.subr.mxu0 0.0
        %579 = vmatpush1.xpose.msra.mxu0 0.0
        %580 = vmatprep.subr.mxu0 0.0
        %581 = vmatpush1.xpose.msra.mxu0 0.0
        %582 = vmatprep.mubr.f32.mxu0 0.0
        %583 = vmatmul.mubr.f32.gmra.mrb[0].mxu0 %v399
        %v584 = vpop.f32.mrb[0].mxu0
        %v585 = vadd.f32 0.0, %v584
        %v586 = vpop.f32.mrb[0].mxu0
        %587 = vmatprep.mubr.f32.mxu0 0.0
        %588 = vmatmul.mubr.f32.gmra.mrb[0].mxu0 %v402
        %v589 = vpop.f32.mrb[0].mxu0
        %v590 = vadd.f32 0.0, %v589
        %v591 = vpop.f32.mrb[0].mxu0
        %592 = vmatprep.mubr.f32.mxu0 0.0
        %593 = vmatmul.mubr.f32.gmra.mrb[0].mxu0 %v405
        %v594 = vpop.f32.mrb[0].mxu0
        %v595 = vadd.f32 0.0, %v594
        %v596 = vpop.f32.mrb[0].mxu0
        %597 = vmatprep.mubr.f32.mxu0 0.0
        %598 = vmatmul.mubr.f32.gmra.mrb[0].mxu0 %v408
        %v599 = vpop.f32.mrb[0].mxu0
        %v600 = vadd.f32 0.0, %v599
        %v601 = vpop.f32.mrb[0].mxu0
        %602 = vmatprep.mubr.f32.mxu0 0.0
        %603 = vmatmul.mubr.f32.gmra.mrb[0].mxu0 %v411
        %v604 = vpop.f32.mrb[0].mxu0
        %v605 = vadd.f32 0.0, %v604
        %v606 = vpop.f32.mrb[0].mxu0
        %607 = vmatprep.mubr.f32.mxu0 0.0
        %608 = vmatmul.mubr.f32.gmra.mrb[0].mxu0 %v414
        %v609 = vpop.f32.mrb[0].mxu0
        %v610 = vadd.f32 0.0, %v609
        %v611 = vpop.f32.mrb[0].mxu0
        %612 = vmatprep.mubr.f32.mxu0 0.0
        %613 = vmatmul.mubr.f32.gmra.mrb[0].mxu0 %v417
        %v614 = vpop.f32.mrb[0].mxu0
        %v615 = vadd.f32 0.0, %v614
        %v616 = vpop.f32.mrb[0].mxu0
        %617 = vmatprep.mubr.f32.mxu0 0.0
        %618 = vmatmul.mubr.f32.gmra.mrb[0].mxu0 %v420
        %v619 = vpop.f32.mrb[0].mxu0
        %v620 = vadd.f32 0.0, %v619
        %v621 = vpop.f32.mrb[0].mxu0
        %622 = vmatprep.mubr.f32.mxu0 0.0
        %623 = vmatmul.mubr.f32.gmra.mrb[0].mxu0 %v423
        %v624 = vpop.f32.mrb[0].mxu0
        %v625 = vadd.f32 0.0, %v624
        %v626 = vpop.f32.mrb[0].mxu0
        %627 = vmatprep.mubr.f32.mxu0 0.0
        %628 = vmatmul.mubr.f32.gmra.mrb[0].mxu0 %v426
        %v629 = vpop.f32.mrb[0].mxu0
        %v630 = vadd.f32 0.0, %v629
        %v631 = vpop.f32.mrb[0].mxu0
        %632 = vmatprep.mubr.f32.mxu0 0.0
        %633 = vmatmul.mubr.f32.gmra.mrb[0].mxu0 %v429
        %v634 = vpop.f32.mrb[0].mxu0
        %v635 = vadd.f32 0.0, %v634
        %v636 = vpop.f32.mrb[0].mxu0
        %637 = vmatprep.mubr.f32.mxu0 0.0
        %638 = vmatmul.mubr.f32.gmra.mrb[0].mxu0 %v432
        %v639 = vpop.f32.mrb[0].mxu0
        %v640 = vadd.f32 0.0, %v639
        %v641 = vpop.f32.mrb[0].mxu0
        %642 = vmatprep.mubr.f32.mxu0 0.0
        %643 = vmatmul.mubr.f32.gmra.mrb[0].mxu0 %v435
        %v644 = vpop.f32.mrb[0].mxu0
        %v645 = vadd.f32 0.0, %v644
        %v646 = vpop.f32.mrb[0].mxu0
        %647 = vmatprep.mubr.f32.mxu0 0.0
        %648 = vmatmul.mubr.f32.gmra.mrb[0].mxu0 %v438
        %v649 = vpop.f32.mrb[0].mxu0
        %v650 = vadd.f32 0.0, %v649
        %v651 = vpop.f32.mrb[0].mxu0
        %652 = vmatprep.mubr.f32.mxu0 0.0
        %653 = vmatmul.mubr.f32.gmra.mrb[0].mxu0 %v441
        %v654 = vpop.f32.mrb[0].mxu0
        %v655 = vadd.f32 0.0, %v654
        %v656 = vpop.f32.mrb[0].mxu0
        %657 = vmatprep.mubr.f32.mxu0 0.0
        %658 = vmatmul.mubr.f32.gmra.mrb[0].mxu0 %v444
        %v659 = vpop.f32.mrb[0].mxu0
        %v660 = vadd.f32 0.0, %v659
        %v661 = vpop.f32.mrb[0].mxu0
        %662 = vmatprep.mubr.f32.mxu0 0.0
        %663 = vmatmul.mubr.f32.gmra.mrb[0].mxu0 %v447
        %v664 = vpop.f32.mrb[0].mxu0
        %v665 = vadd.f32 0.0, %v664
        %v666 = vpop.f32.mrb[0].mxu0
        %667 = vmatprep.mubr.f32.mxu0 0.0
        %668 = vmatmul.mubr.f32.gmra.mrb[0].mxu0 %v450
        %v669 = vpop.f32.mrb[0].mxu0
        %v670 = vadd.f32 0.0, %v669
        %v671 = vpop.f32.mrb[0].mxu0
        %672 = vmatprep.mubr.f32.mxu0 0.0
        %673 = vmatmul.mubr.f32.gmra.mrb[0].mxu0 %v453
        %v674 = vpop.f32.mrb[0].mxu0
        %v675 = vadd.f32 0.0, %v674
        %v676 = vpop.f32.mrb[0].mxu0
        %677 = vmatprep.mubr.f32.mxu0 0.0
        %678 = vmatmul.mubr.f32.gmra.mrb[0].mxu0 %v456
        %v679 = vpop.f32.mrb[0].mxu0
        %v680 = vadd.f32 0.0, %v679
        %v681 = vpop.f32.mrb[0].mxu0
        %682 = vmatprep.mubr.f32.mxu0 0.0
        %683 = vmatmul.mubr.f32.gmra.mrb[0].mxu0 %v459
        %v684 = vpop.f32.mrb[0].mxu0
        %v685 = vadd.f32 0.0, %v684
        %v686 = vpop.f32.mrb[0].mxu0
        %687 = vmatprep.mubr.f32.mxu0 0.0
        %688 = vmatmul.mubr.f32.gmra.mrb[0].mxu0 %v462
        %v689 = vpop.f32.mrb[0].mxu0
        %v690 = vadd.f32 0.0, %v689
        %v691 = vpop.f32.mrb[0].mxu0
        %692 = vmatprep.mubr.f32.mxu0 0.0
        %693 = vmatmul.mubr.f32.gmra.mrb[0].mxu0 %v465
        %v694 = vpop.f32.mrb[0].mxu0
        %v695 = vadd.f32 0.0, %v694
        %v696 = vpop.f32.mrb[0].mxu0
        %697 = vmatprep.mubr.f32.mxu0 0.0
        %698 = vmatmul.mubr.f32.gmra.mrb[0].mxu0 %v468
        %v699 = vpop.f32.mrb[0].mxu0
        %v700 = vadd.f32 0.0, %v699
        %v701 = vpop.f32.mrb[0].mxu0
        %702 = vmatprep.mubr.f32.mxu0 0.0
        %703 = vmatmul.mubr.f32.gmra.mrb[0].mxu0 %v471
        %v704 = vpop.f32.mrb[0].mxu0
        %v705 = vadd.f32 0.0, %v704
        %v706 = vpop.f32.mrb[0].mxu0
        %707 = vmatprep.mubr.f32.mxu0 0.0
        %708 = vmatmul.mubr.f32.gmra.mrb[0].mxu0 %v474
        %v709 = vpop.f32.mrb[0].mxu0
        %v710 = vadd.f32 0.0, %v709
        %v711 = vpop.f32.mrb[0].mxu0
        %712 = vmatprep.mubr.f32.mxu0 0.0
        %713 = vmatmul.mubr.f32.gmra.mrb[0].mxu0 %v477
        %v714 = vpop.f32.mrb[0].mxu0
        %v715 = vadd.f32 0.0, %v714
        %v716 = vpop.f32.mrb[0].mxu0
        %717 = vmatprep.mubr.f32.mxu0 0.0
        %718 = vmatmul.mubr.f32.gmra.mrb[0].mxu0 %v480
        %v719 = vpop.f32.mrb[0].mxu0
        %v720 = vadd.f32 0.0, %v719
        %v721 = vpop.f32.mrb[0].mxu0
        %722 = vmatprep.mubr.f32.mxu0 0.0
        %723 = vmatmul.mubr.f32.gmra.mrb[0].mxu0 %v483
        %v724 = vpop.f32.mrb[0].mxu0
        %v725 = vadd.f32 0.0, %v724
        %v726 = vpop.f32.mrb[0].mxu0
        %727 = vmatprep.mubr.f32.mxu0 0.0
        %728 = vmatmul.mubr.f32.gmra.mrb[0].mxu0 %v486
        %v729 = vpop.f32.mrb[0].mxu0
        %v730 = vadd.f32 0.0, %v729
        %v731 = vpop.f32.mrb[0].mxu0
        %732 = vmatprep.mubr.f32.mxu0 0.0
        %733 = vmatmul.mubr.f32.gmra.mrb[0].mxu0 %v489
        %v734 = vpop.f32.mrb[0].mxu0
        %v735 = vadd.f32 0.0, %v734
        %v736 = vpop.f32.mrb[0].mxu0
        %737 = vmatprep.mubr.f32.mxu0 0.0
        %738 = vmatmul.mubr.f32.gmra.mrb[0].mxu0 %v492
        %v739 = vpop.f32.mrb[0].mxu0
        %v740 = vadd.f32 0.0, %v739
        %v741 = vpop.f32.mrb[0].mxu0
        %742 = vdwg.mxu0
        %v744 = vsel %vm397, %v323, 0
        %v747 = vsel %vm397, %v585, 0
        %v750 = vsel %vm397, %v590, 0
        %v753 = vsel %vm397, %v595, 0
        %v756 = vsel %vm397, %v600, 0
        %v759 = vsel %vm397, %v605, 0
        %v762 = vsel %vm397, %v610, 0
        %v765 = vsel %vm397, %v615, 0
        %v768 = vsel %vm397, %v620, 0
        %v771 = vsel %vm397, %v625, 0
        %v774 = vsel %vm397, %v630, 0
        %v777 = vsel %vm397, %v635, 0
        %v780 = vsel %vm397, %v640, 0
        %v783 = vsel %vm397, %v645, 0
        %v786 = vsel %vm397, %v650, 0
        %v789 = vsel %vm397, %v655, 0
        %v792 = vsel %vm397, %v660, 0
        %794 = vmatprep.subr.mxu0 0.0
        %795 = vmatpush1.xpose.msra.mxu0 %v747
        %796 = vmatprep.subr.mxu0 0.0
        %797 = vmatpush1.xpose.msra.mxu0 %v750
        %798 = vmatprep.subr.mxu0 0.0
        %799 = vmatpush1.xpose.msra.mxu0 %v753
        %800 = vmatprep.subr.mxu0 0.0
        %801 = vmatpush1.xpose.msra.mxu0 %v756
        %802 = vmatprep.subr.mxu0 0.0
        %803 = vmatpush1.xpose.msra.mxu0 %v759
        %804 = vmatprep.subr.mxu0 0.0
        %805 = vmatpush1.xpose.msra.mxu0 %v762
        %806 = vmatprep.subr.mxu0 0.0
        %807 = vmatpush1.xpose.msra.mxu0 %v765
        %808 = vmatprep.subr.mxu0 0.0
        %809 = vmatpush1.xpose.msra.mxu0 %v768
        %810 = vmatprep.subr.mxu0 0.0
        %811 = vmatpush1.xpose.msra.mxu0 %v771
        %812 = vmatprep.subr.mxu0 0.0
        %813 = vmatpush1.xpose.msra.mxu0 %v774
        %814 = vmatprep.subr.mxu0 0.0
        %815 = vmatpush1.xpose.msra.mxu0 %v777
        %816 = vmatprep.subr.mxu0 0.0
        %817 = vmatpush1.xpose.msra.mxu0 %v780
        %818 = vmatprep.subr.mxu0 0.0
        %819 = vmatpush1.xpose.msra.mxu0 %v783
        %820 = vmatprep.subr.mxu0 0.0
        %821 = vmatpush1.xpose.msra.mxu0 %v786
        %822 = vmatprep.subr.mxu0 0.0
        %823 = vmatpush1.xpose.msra.mxu0 %v789
        %824 = vmatprep.subr.mxu0 0.0
        %825 = vmatpush1.xpose.msra.mxu0 %v792
        %826 = vmatprep.subr.mxu0 0.0
        %827 = vmatpush1.xpose.msra.mxu0 0.0
        %828 = vmatprep.subr.mxu0 0.0
        %829 = vmatpush1.xpose.msra.mxu0 0.0
        %830 = vmatprep.subr.mxu0 0.0
        %831 = vmatpush1.xpose.msra.mxu0 0.0
        %832 = vmatprep.subr.mxu0 0.0
        %833 = vmatpush1.xpose.msra.mxu0 0.0
        %834 = vmatprep.subr.mxu0 0.0
        %835 = vmatpush1.xpose.msra.mxu0 0.0
        %836 = vmatprep.subr.mxu0 0.0
        %837 = vmatpush1.xpose.msra.mxu0 0.0
        %838 = vmatprep.subr.mxu0 0.0
        %839 = vmatpush1.xpose.msra.mxu0 0.0
        %840 = vmatprep.subr.mxu0 0.0
        %841 = vmatpush1.xpose.msra.mxu0 0.0
        %842 = vmatprep.subr.mxu0 0.0
        %843 = vmatpush1.xpose.msra.mxu0 0.0
        %844 = vmatprep.subr.mxu0 0.0
        %845 = vmatpush1.xpose.msra.mxu0 0.0
        %846 = vmatprep.subr.mxu0 0.0
        %847 = vmatpush1.xpose.msra.mxu0 0.0
        %848 = vmatprep.subr.mxu0 0.0
        %849 = vmatpush1.xpose.msra.mxu0 0.0
        %850 = vmatprep.subr.mxu0 0.0
        %851 = vmatpush1.xpose.msra.mxu0 0.0
        %852 = vmatprep.subr.mxu0 0.0
        %853 = vmatpush1.xpose.msra.mxu0 0.0
        %854 = vmatprep.subr.mxu0 0.0
        %855 = vmatpush1.xpose.msra.mxu0 0.0
        %856 = vmatprep.subr.mxu0 0.0
        %857 = vmatpush1.xpose.msra.mxu0 0.0
        %858 = vmatprep.mubr.f32.mxu0 0.0
        %859 = vmatmul.mubr.f32.gmra.mrb[0].mxu0 %v744
        %v860 = vpop.f32.mrb[0].mxu0
        %v861 = vadd.f32 0.0, %v860
        %v862 = vpop.f32.mrb[0].mxu0
        %863 = vdwg.mxu0
        %v865 = vsel %vm397, %v324, 0
        %v868 = vsel %vm397, %v665, 0
        %v871 = vsel %vm397, %v670, 0
        %v874 = vsel %vm397, %v675, 0
        %v877 = vsel %vm397, %v680, 0
        %v880 = vsel %vm397, %v685, 0
        %v883 = vsel %vm397, %v690, 0
        %v886 = vsel %vm397, %v695, 0
        %v889 = vsel %vm397, %v700, 0
        %v892 = vsel %vm397, %v705, 0
        %v895 = vsel %vm397, %v710, 0
        %v898 = vsel %vm397, %v715, 0
        %v901 = vsel %vm397, %v720, 0
        %v904 = vsel %vm397, %v725, 0
        %v907 = vsel %vm397, %v730, 0
        %v910 = vsel %vm397, %v735, 0
        %v913 = vsel %vm397, %v740, 0
        %915 = vmatprep.subr.mxu0 0.0
        %916 = vmatpush1.xpose.msra.mxu0 %v868
        %917 = vmatprep.subr.mxu0 0.0
        %918 = vmatpush1.xpose.msra.mxu0 %v871
        %919 = vmatprep.subr.mxu0 0.0
        %920 = vmatpush1.xpose.msra.mxu0 %v874
        %921 = vmatprep.subr.mxu0 0.0
        %922 = vmatpush1.xpose.msra.mxu0 %v877
        %923 = vmatprep.subr.mxu0 0.0
        %924 = vmatpush1.xpose.msra.mxu0 %v880
        %925 = vmatprep.subr.mxu0 0.0
        %926 = vmatpush1.xpose.msra.mxu0 %v883
        %927 = vmatprep.subr.mxu0 0.0
        %928 = vmatpush1.xpose.msra.mxu0 %v886
        %929 = vmatprep.subr.mxu0 0.0
        %930 = vmatpush1.xpose.msra.mxu0 %v889
        %931 = vmatprep.subr.mxu0 0.0
        %932 = vmatpush1.xpose.msra.mxu0 %v892
        %933 = vmatprep.subr.mxu0 0.0
        %934 = vmatpush1.xpose.msra.mxu0 %v895
        %935 = vmatprep.subr.mxu0 0.0
        %936 = vmatpush1.xpose.msra.mxu0 %v898
        %937 = vmatprep.subr.mxu0 0.0
        %938 = vmatpush1.xpose.msra.mxu0 %v901
        %939 = vmatprep.subr.mxu0 0.0
        %940 = vmatpush1.xpose.msra.mxu0 %v904
        %941 = vmatprep.subr.mxu0 0.0
        %942 = vmatpush1.xpose.msra.mxu0 %v907
        %943 = vmatprep.subr.mxu0 0.0
        %944 = vmatpush1.xpose.msra.mxu0 %v910
        %945 = vmatprep.subr.mxu0 0.0
        %946 = vmatpush1.xpose.msra.mxu0 %v913
        %947 = vmatprep.subr.mxu0 0.0
        %948 = vmatpush1.xpose.msra.mxu0 0.0
        %949 = vmatprep.subr.mxu0 0.0
        %950 = vmatpush1.xpose.msra.mxu0 0.0
        %951 = vmatprep.subr.mxu0 0.0
        %952 = vmatpush1.xpose.msra.mxu0 0.0
        %953 = vmatprep.subr.mxu0 0.0
        %954 = vmatpush1.xpose.msra.mxu0 0.0
        %955 = vmatprep.subr.mxu0 0.0
        %956 = vmatpush1.xpose.msra.mxu0 0.0
        %957 = vmatprep.subr.mxu0 0.0
        %958 = vmatpush1.xpose.msra.mxu0 0.0
        %959 = vmatprep.subr.mxu0 0.0
        %960 = vmatpush1.xpose.msra.mxu0 0.0
        %961 = vmatprep.subr.mxu0 0.0
        %962 = vmatpush1.xpose.msra.mxu0 0.0
        %963 = vmatprep.subr.mxu0 0.0
        %964 = vmatpush1.xpose.msra.mxu0 0.0
        %965 = vmatprep.subr.mxu0 0.0
        %966 = vmatpush1.xpose.msra.mxu0 0.0
        %967 = vmatprep.subr.mxu0 0.0
        %968 = vmatpush1.xpose.msra.mxu0 0.0
        %969 = vmatprep.subr.mxu0 0.0
        %970 = vmatpush1.xpose.msra.mxu0 0.0
        %971 = vmatprep.subr.mxu0 0.0
        %972 = vmatpush1.xpose.msra.mxu0 0.0
        %973 = vmatprep.subr.mxu0 0.0
        %974 = vmatpush1.xpose.msra.mxu0 0.0
        %975 = vmatprep.subr.mxu0 0.0
        %976 = vmatpush1.xpose.msra.mxu0 0.0
        %977 = vmatprep.subr.mxu0 0.0
        %978 = vmatpush1.xpose.msra.mxu0 0.0
        %979 = vmatprep.mubr.f32.mxu0 0.0
        %980 = vmatmul.mubr.f32.gmra.mrb[0].mxu0 %v865
        %v981 = vpop.f32.mrb[0].mxu0
        %v982 = vadd.f32 0.0, %v981
        %v983 = vpop.f32.mrb[0].mxu0
        %984 = vdwg.mxu0
        %985 = vmax.xlane.f32.xlu0 %v861
        %v986 = vpop.xlane.xlu0 %985
        %987 = vmax.xlane.f32.xlu0 %v982
        %v988 = vpop.xlane.xlu0 %987
        %v989 = vsub.f32 %v861, %v986
        %v990 = vsub.f32 %v982, %v988
        %v991 = vmul.f32 %v989, 1.442695
        %v992 = vpow.pop %v991
        %v993 = vmul.f32 %v990, 1.442695
        %v994 = vpow.pop %v993
        %995 = vadd.xlane.f32.xlu0 %v992
        %v996 = vpop.xlane.xlu0 %995
        %997 = vadd.xlane.f32.xlu0 %v994
        %v998 = vpop.xlane.xlu0 %997
        %v999 = vrcp.pop %v996
        %v1000 = vrcp.pop %v998
        %v1001 = vmul.f32 %v992, %v999
        %v1002 = vmul.f32 %v994, %v1000
        %1003 = vmatprep.subr.mxu0 0.0
        %1004 = vmatpush1.msra.mxu0 %v357
        %1005 = vmatprep.subr.mxu0 0.0
        %1006 = vmatpush1.msra.mxu0 %v358
        %1007 = vmatprep.subr.mxu0 0.0
        %1008 = vmatpush1.msra.mxu0 %v359
        %1009 = vmatprep.subr.mxu0 0.0
        %1010 = vmatpush1.msra.mxu0 %v360
        %1011 = vmatprep.subr.mxu0 0.0
        %1012 = vmatpush1.msra.mxu0 %v361
        %1013 = vmatprep.subr.mxu0 0.0
        %1014 = vmatpush1.msra.mxu0 %v362
        %1015 = vmatprep.subr.mxu0 0.0
        %1016 = vmatpush1.msra.mxu0 %v363
        %1017 = vmatprep.subr.mxu0 0.0
        %1018 = vmatpush1.msra.mxu0 %v364
        %1019 = vmatprep.subr.mxu0 0.0
        %1020 = vmatpush1.msra.mxu0 %v365
        %1021 = vmatprep.subr.mxu0 0.0
        %1022 = vmatpush1.msra.mxu0 %v366
        %1023 = vmatprep.subr.mxu0 0.0
        %1024 = vmatpush1.msra.mxu0 %v367
        %1025 = vmatprep.subr.mxu0 0.0
        %1026 = vmatpush1.msra.mxu0 %v368
        %1027 = vmatprep.subr.mxu0 0.0
        %1028 = vmatpush1.msra.mxu0 %v369
        %1029 = vmatprep.subr.mxu0 0.0
        %1030 = vmatpush1.msra.mxu0 %v370
        %1031 = vmatprep.subr.mxu0 0.0
        %1032 = vmatpush1.msra.mxu0 %v371
        %1033 = vmatprep.subr.mxu0 0.0
        %1034 = vmatpush1.msra.mxu0 %v372
        %1035 = vmatprep.subr.mxu0 0.0
        %1036 = vmatpush1.msra.mxu0 0.0
        %1037 = vmatprep.subr.mxu0 0.0
        %1038 = vmatpush1.msra.mxu0 0.0
        %1039 = vmatprep.subr.mxu0 0.0
        %1040 = vmatpush1.msra.mxu0 0.0
        %1041 = vmatprep.subr.mxu0 0.0
        %1042 = vmatpush1.msra.mxu0 0.0
        %1043 = vmatprep.subr.mxu0 0.0
        %1044 = vmatpush1.msra.mxu0 0.0
        %1045 = vmatprep.subr.mxu0 0.0
        %1046 = vmatpush1.msra.mxu0 0.0
        %1047 = vmatprep.subr.mxu0 0.0
        %1048 = vmatpush1.msra.mxu0 0.0
        %1049 = vmatprep.subr.mxu0 0.0
        %1050 = vmatpush1.msra.mxu0 0.0
        %1051 = vmatprep.subr.mxu0 0.0
        %1052 = vmatpush1.msra.mxu0 0.0
        %1053 = vmatprep.subr.mxu0 0.0
        %1054 = vmatpush1.msra.mxu0 0.0
        %1055 = vmatprep.subr.mxu0 0.0
        %1056 = vmatpush1.msra.mxu0 0.0
        %1057 = vmatprep.subr.mxu0 0.0
        %1058 = vmatpush1.msra.mxu0 0.0
        %1059 = vmatprep.subr.mxu0 0.0
        %1060 = vmatpush1.msra.mxu0 0.0
        %1061 = vmatprep.subr.mxu0 0.0
        %1062 = vmatpush1.msra.mxu0 0.0
        %1063 = vmatprep.subr.mxu0 0.0
        %1064 = vmatpush1.msra.mxu0 0.0
        %1065 = vmatprep.subr.mxu0 0.0
        %1066 = vmatpush1.msra.mxu0 0.0
        %1067 = vmatprep.mubr.f32.mxu0 0.0
        %1068 = vmatmul.mubr.f32.gmra.mrb[0].mxu0 %v1001
        %v1069 = vpop.f32.mrb[0].mxu0
        %v1070 = vadd.f32 0.0, %v1069
        %v1071 = vpop.f32.mrb[0].mxu0
        %1072 = vdwg.mxu0
        %1073 = vmatprep.subr.mxu0 0.0
        %1074 = vmatpush1.msra.mxu0 %v373
        %1075 = vmatprep.subr.mxu0 0.0
        %1076 = vmatpush1.msra.mxu0 %v374
        %1077 = vmatprep.subr.mxu0 0.0
        %1078 = vmatpush1.msra.mxu0 %v375
        %1079 = vmatprep.subr.mxu0 0.0
        %1080 = vmatpush1.msra.mxu0 %v376
        %1081 = vmatprep.subr.mxu0 0.0
        %1082 = vmatpush1.msra.mxu0 %v377
        %1083 = vmatprep.subr.mxu0 0.0
        %1084 = vmatpush1.msra.mxu0 %v378
        %1085 = vmatprep.subr.mxu0 0.0
        %1086 = vmatpush1.msra.mxu0 %v379
        %1087 = vmatprep.subr.mxu0 0.0
        %1088 = vmatpush1.msra.mxu0 %v380
        %1089 = vmatprep.subr.mxu0 0.0
        %1090 = vmatpush1.msra.mxu0 %v381
        %1091 = vmatprep.subr.mxu0 0.0
        %1092 = vmatpush1.msra.mxu0 %v382
        %1093 = vmatprep.subr.mxu0 0.0
        %1094 = vmatpush1.msra.mxu0 %v383
        %1095 = vmatprep.subr.mxu0 0.0
        %1096 = vmatpush1.msra.mxu0 %v384
        %1097 = vmatprep.subr.mxu0 0.0
        %1098 = vmatpush1.msra.mxu0 %v385
        %1099 = vmatprep.subr.mxu0 0.0
        %1100 = vmatpush1.msra.mxu0 %v386
        %1101 = vmatprep.subr.mxu0 0.0
        %1102 = vmatpush1.msra.mxu0 %v387
        %1103 = vmatprep.subr.mxu0 0.0
        %1104 = vmatpush1.msra.mxu0 %v388
        %1105 = vmatprep.subr.mxu0 0.0
        %1106 = vmatpush1.msra.mxu0 0.0
        %1107 = vmatprep.subr.mxu0 0.0
        %1108 = vmatpush1.msra.mxu0 0.0
        %1109 = vmatprep.subr.mxu0 0.0
        %1110 = vmatpush1.msra.mxu0 0.0
        %1111 = vmatprep.subr.mxu0 0.0
        %1112 = vmatpush1.msra.mxu0 0.0
        %1113 = vmatprep.subr.mxu0 0.0
        %1114 = vmatpush1.msra.mxu0 0.0
        %1115 = vmatprep.subr.mxu0 0.0
        %1116 = vmatpush1.msra.mxu0 0.0
        %1117 = vmatprep.subr.mxu0 0.0
        %1118 = vmatpush1.msra.mxu0 0.0
        %1119 = vmatprep.subr.mxu0 0.0
        %1120 = vmatpush1.msra.mxu0 0.0
        %1121 = vmatprep.subr.mxu0 0.0
        %1122 = vmatpush1.msra.mxu0 0.0
        %1123 = vmatprep.subr.mxu0 0.0
        %1124 = vmatpush1.msra.mxu0 0.0
        %1125 = vmatprep.subr.mxu0 0.0
        %1126 = vmatpush1.msra.mxu0 0.0
        %1127 = vmatprep.subr.mxu0 0.0
        %1128 = vmatpush1.msra.mxu0 0.0
        %1129 = vmatprep.subr.mxu0 0.0
        %1130 = vmatpush1.msra.mxu0 0.0
        %1131 = vmatprep.subr.mxu0 0.0
        %1132 = vmatpush1.msra.mxu0 0.0
        %1133 = vmatprep.subr.mxu0 0.0
        %1134 = vmatpush1.msra.mxu0 0.0
        %1135 = vmatprep.subr.mxu0 0.0
        %1136 = vmatpush1.msra.mxu0 0.0
        %1137 = vmatprep.mubr.f32.mxu0 0.0
        %1138 = vmatmul.mubr.f32.gmra.mrb[0].mxu0 %v1002
        %v1139 = vpop.f32.mrb[0].mxu0
        %v1140 = vadd.f32 0.0, %v1139
        %v1141 = vpop.f32.mrb[0].mxu0
        %1142 = vdwg.mxu0
        %1143 = vst [vmem:[%s299] sm:$0xff] %v861
        %1144 = vst [vmem:[%s299 + $0x8] sm:$0xff] %v982
        %1145 = vst [vmem:[%s292] sm:$0xff] %v1001
        %1146 = vst [vmem:[%s292 + $0x8] sm:$0xff] %v1002
        %1147 = vst.msk [vmem:[%s285] sm:$0xff] %vm397, %v1070
        %1148 = vst.msk [vmem:[%s285 + $0x8] sm:$0xff] %vm397, %v1140
        %s1149 = sand.u32 %s131, 1
        %s1150 = scalar_lea.sflag [#allocation3], %s1149
        %s1151 = sand.u32 %s131, 1
        %s1152 = smul.addr %s1151, 16
        %s1153 = scalar_lea.vmem [#allocation2], %s1152
        %s1154 = sand.u32 %s24, 1
        %s1155 = scalar_lea.sflag [#allocation5], %s1154
        %s1156 = sand.u32 %s157, 1
        %s1157 = smul.addr %s1156, 16
        %s1158 = scalar_lea.vmem [#allocation4], %s1157
        %s1159 = sand.u32 %s24, 1
        %s1160 = scalar_lea.sflag [#allocation5], %s1159
        %s1161 = sand.u32 %s183, 1
        %s1162 = smul.addr %s1161, 16
        %s1163 = scalar_lea.vmem [#allocation6], %s1162
        // Predicated region
        $region37: #{tpu_custom_call.1} parent=35 // pred_check
          %p1164 = pneg %p141
        $region38: #{tpu_custom_call.1} parent=35 // pred_check_branch
          %1166 = sbr.rel (%p1164) target = $region40
        $region39: #{tpu_custom_call.1} parent=35 // pred_region
          %s1167 = smul.u32 2, %s24
          %s1169 = ssub.s32 256, 256
          %1170 = vsyncadd %s1150, %s1169
          %s1171 = smul.addr %s1167, 128
          %s1172 = scalar_lea.hbm %s4, %s1171
          %s1173 = sshll.u32 %s1153, 4
          %s1174 = int_to_ptr.vmem [resolvable:$true] %s1173
          %1179 = dma.vmem_to_hbm [thread:$0]  %s1174, 256, %s1172, %s1150, 128, 128, 8
        $region40: #{tpu_custom_call.1} parent=35 // pred_fallthru
          _
        // Predicated region
        $region41: #{tpu_custom_call.1} parent=35 // pred_check
          %p1180 = pneg %p167
        $region42: #{tpu_custom_call.1} parent=35 // pred_check_branch
          %1182 = sbr.rel (%p1180) target = $region44
        $region43: #{tpu_custom_call.1} parent=35 // pred_region
          %s1183 = smul.u32 2, %s24
          %s1185 = ssub.s32 256, 256
          %1186 = vsyncadd %s1155, %s1185
          %s1187 = smul.addr %s1183, 128
          %s1188 = scalar_lea.hbm %s5, %s1187
          %s1189 = sshll.u32 %s1158, 4
          %s1190 = int_to_ptr.vmem [resolvable:$true] %s1189
          %1195 = dma.vmem_to_hbm [thread:$0]  %s1190, 256, %s1188, %s1155, 128, 128, 8
        $region44: #{tpu_custom_call.1} parent=35 // pred_fallthru
          _
        // Predicated region
        $region45: #{tpu_custom_call.1} parent=35 // pred_check
          %p1196 = pneg %p193
        $region46: #{tpu_custom_call.1} parent=35 // pred_check_branch
          %1198 = sbr.rel (%p1196) target = $region48
        $region47: #{tpu_custom_call.1} parent=35 // pred_region
          %s1199 = smul.u32 2, %s24
          %s1201 = ssub.s32 256, 256
          %1202 = vsyncadd %s1160, %s1201
          %s1203 = smul.addr %s1199, 128
          %s1204 = scalar_lea.hbm %s6, %s1203
          %s1205 = sshll.u32 %s1163, 4
          %s1206 = int_to_ptr.vmem [resolvable:$true] %s1205
          %1211 = dma.vmem_to_hbm [thread:$0]  %s1206, 256, %s1204, %s1160, 128, 128, 8
        $region48: #{tpu_custom_call.1} parent=35 // pred_fallthru
          _
      $region36: #{tpu_custom_call.1} parent=5 // pred_fallthru
        _
      %p1212 = scmp.le.s32.totalorder 2, %s19
      // Predicated region
      $region49: #{tpu_custom_call.1} parent=5 // pred_check
        %p1213 = pneg %p1212
      $region50: #{tpu_custom_call.1} parent=5 // pred_check_branch
        %1215 = sbr.rel (%p1213) target = $region52
      $region51: #{tpu_custom_call.1} parent=5 // pred_region
        %s1216 = ssub.s32 %s19, 2
        // Predicated region
        $region53: #{tpu_custom_call.1} parent=51 // pred_check
          %p1217 = pneg %p147
        $region54: #{tpu_custom_call.1} parent=51 // pred_check_branch
          %1219 = sbr.rel (%p1217) target = $region56
        $region55: #{tpu_custom_call.1} parent=51 // pred_region
          %s1220 = sand.u32 %s132, 1
          %s1221 = scalar_lea.sflag [#allocation3], %s1220
          %s1222 = sand.u32 %s132, 1
          %s1223 = smul.addr %s1222, 16
          %s1224 = scalar_lea.vmem [#allocation2], %s1223
          %1225 = dma.done %s1221, 256
        $region56: #{tpu_custom_call.1} parent=51 // pred_fallthru
          _
        // Predicated region
        $region57: #{tpu_custom_call.1} parent=51 // pred_check
          %p1226 = pneg %p173
        $region58: #{tpu_custom_call.1} parent=51 // pred_check_branch
          %1228 = sbr.rel (%p1226) target = $region60
        $region59: #{tpu_custom_call.1} parent=51 // pred_region
          %s1229 = sand.u32 %s25, 1
          %s1230 = scalar_lea.sflag [#allocation5], %s1229
          %s1231 = sand.u32 %s158, 1
          %s1232 = smul.addr %s1231, 16
          %s1233 = scalar_lea.vmem [#allocation4], %s1232
          %1234 = dma.done %s1230, 256
        $region60: #{tpu_custom_call.1} parent=51 // pred_fallthru
          _
        // Predicated region
        $region61: #{tpu_custom_call.1} parent=51 // pred_check
          %p1235 = pneg %p199
        $region62: #{tpu_custom_call.1} parent=51 // pred_check_branch
          %1237 = sbr.rel (%p1235) target = $region64
        $region63: #{tpu_custom_call.1} parent=51 // pred_region
          %s1238 = sand.u32 %s25, 1
          %s1239 = scalar_lea.sflag [#allocation5], %s1238
          %s1240 = sand.u32 %s184, 1
          %s1241 = smul.addr %s1240, 16
          %s1242 = scalar_lea.vmem [#allocation6], %s1241
          %1243 = dma.done %s1239, 256
        $region64: #{tpu_custom_call.1} parent=51 // pred_fallthru
          _
      $region52: #{tpu_custom_call.1} parent=5 // pred_fallthru
        _
    $region6: #{tpu_custom_call.1} parent=1 // loop_footer
      %s23 = sadd.s32 1, %s19
    $region7: #{tpu_custom_call.1} parent=1 // loop_footer_branch
      %18 = sbr.rel target = $region3
    $region8: #{tpu_custom_call.1} parent=1 // loop_exit
      _
    %1244 = vsyncpa [#allocation3], 1
    %s1245 = scalar_lea.sflag [#allocation3], 1
    %1246 = vsyncpa %s1245, 1
    %1247 = vsyncpa [#allocation5], 1
    %s1248 = scalar_lea.sflag [#allocation5], 1
    %1249 = vsyncpa %s1248, 1

</llo_original>
